<compile_context>
chip_gen: v6e
topology: v6e:2x2x1
jax: 0.10.0
libtpu: 0.0.40
codegen_flags: <defaults>
</compile_context>

<pallas_src>
import functools

import jax
import jax.numpy as jnp
from jax.experimental import pallas as pl
from jax.experimental.pallas import tpu as pltpu


def _linear_clamp_kernel(x_ref, w_ref, b_ref, o_ref, *, min_value, max_value):
    # One MXU push per M tile + bias add + clamp (VPU, immediates).
    y = jnp.dot(x_ref[...], w_ref[...], preferred_element_type=jnp.float32)
    y = y + b_ref[...]                 # (1, N) broadcasts over the M tile
    y = jnp.maximum(y, min_value)      # torch.clamp_min
    y = jnp.minimum(y, max_value)      # torch.clamp_max
    o_ref[...] = y.astype(o_ref.dtype)


def linear_clamp(x, w, b, min_value, max_value, *, tile_m=128):
    """x: (M, K) f32, w: (K, N) f32, b: (N,) f32 -> (M, N) f32."""
    M, K = x.shape
    K2, N = w.shape
    assert K == K2 and b.shape == (N,)

    # Pick the M tile: for small M just pad to the f32 sublane multiple (8);
    # for large M use full tiles of `tile_m` and shard them across cores.
    if M < tile_m:
        tile_m = max(8, int(pl.cdiv(M, 8)) * 8)
    m_pad = int(pl.cdiv(M, tile_m)) * tile_m
    if m_pad != M:
        x = jnp.pad(x, ((0, m_pad - M), (0, 0)))
    grid = (m_pad // tile_m,)

    b2 = b.reshape(1, N)

    kernel = functools.partial(
        _linear_clamp_kernel,
        min_value=float(min_value),
        max_value=float(max_value),
    )

    itemsize = jnp.dtype(jnp.float32).itemsize
    cost = pl.CostEstimate(
        flops=2 * m_pad * K * N,
        transcendentals=0,
        bytes_accessed=(m_pad * K + K * N + N + m_pad * N) * itemsize,
    )

    out = pl.pallas_call(
        kernel,
        out_shape=jax.ShapeDtypeStruct((m_pad, N), jnp.float32),
        grid=grid,
        in_specs=[
            # Activation tile marches over M.
            pl.BlockSpec((tile_m, K), lambda i: (i, 0)),
            # Weight + bias: constant block index -> fetched once, VMEM-resident.
            pl.BlockSpec((K, N), lambda i: (0, 0)),
            pl.BlockSpec((1, N), lambda i: (0, 0)),
        ],
        out_specs=pl.BlockSpec((tile_m, N), lambda i: (i, 0)),
        compiler_params=pltpu.CompilerParams(
            dimension_semantics=("parallel",),   # v7x: split M tiles across 2 TCs
        ),
        cost_estimate=cost,
    )(x, w, b2)

    return out[:M]


if __name__ == "__main__":
    key = jax.random.PRNGKey(0)
    kx, kw, kb, kx2 = jax.random.split(key, 4)

    M, K, N = 1, 64, 128  # shapes implied by the PyTorch module (x1 = randn(1, 64))
    bound = 1.0 / (K ** 0.5)
    x = jax.random.normal(kx, (M, K), dtype=jnp.float32)
    w = jax.random.uniform(kw, (K, N), dtype=jnp.float32, minval=-bound, maxval=bound)
    b = jax.random.uniform(kb, (N,), dtype=jnp.float32, minval=-bound, maxval=bound)

    min_value = -0.5
    max_value = 0.5

    # Spec-shaped call (M = 1).
    out = linear_clamp(x, w, b, min_value, max_value)
    jax.block_until_ready(out)
    ref = jnp.clip(x @ w + b, min_value, max_value)
    assert out.shape == (M, N)
    assert jnp.allclose(out, ref, atol=1e-5, rtol=1e-5)

    # Batched call exercising the M grid (weight DMA'd once, tiles sharded).
    M2 = 256
    x_big = jax.random.normal(kx2, (M2, K), dtype=jnp.float32)
    out_big = linear_clamp(x_big, w, b, min_value, max_value)
    jax.block_until_ready(out_big)
    ref_big = jnp.clip(x_big @ w + b, min_value, max_value)
    assert out_big.shape == (M2, N)
    assert jnp.allclose(out_big, ref_big, atol=1e-5, rtol=1e-5)

    print("KERNEL_OK")
</pallas_src>

<mosaic_0001>
module attributes {stable_mosaic.version = 11 : i64} {
  func.func @_linear_clamp_kernel(%arg0: i32, %arg1: memref<8x64xf32, #tpu.memory_space<vmem>>, %arg2: memref<64x128xf32, #tpu.memory_space<vmem>>, %arg3: memref<1x128xf32, #tpu.memory_space<vmem>>, %arg4: memref<8x128xf32, #tpu.memory_space<vmem>>) attributes {dimension_semantics = [#tpu.dimension_semantics<parallel>], iteration_bounds = array<i64: 1>, scalar_prefetch = 0 : i64, scratch_operands = 0 : i64, tpu.core_type = #tpu.core_type<tc>, window_params = [{transform_indices = @transform_0, window_bounds = array<i64: 8, 64>}, {pipeline_mode = #tpu.pipeline_mode<synchronous>, transform_indices = @transform_1, window_bounds = array<i64: 64, 128>}, {pipeline_mode = #tpu.pipeline_mode<synchronous>, transform_indices = @transform_2, window_bounds = array<i64: 1, 128>}, {transform_indices = @transform_3, window_bounds = array<i64: 8, 128>}]} {
    %c0 = arith.constant 0 : index
    %c0_0 = arith.constant 0 : index
    %0 = vector.load %arg1[%c0, %c0_0] : memref<8x64xf32, #tpu.memory_space<vmem>>, vector<8x64xf32>
    %c0_1 = arith.constant 0 : index
    %c0_2 = arith.constant 0 : index
    %1 = vector.load %arg2[%c0_1, %c0_2] : memref<64x128xf32, #tpu.memory_space<vmem>>, vector<64x128xf32>
    %cst = arith.constant dense<0.000000e+00> : vector<8x128xf32>
    %2 = tpu.matmul %0, %1, %cst {dimension_numbers = #tpu.dot_dimension_numbers<[1], [0], [0], [1], [0, 0, 1, 1], [], []>} : vector<8x64xf32>, vector<64x128xf32>, vector<8x128xf32> -> vector<8x128xf32>
    %c0_3 = arith.constant 0 : index
    %c0_4 = arith.constant 0 : index
    %3 = vector.load %arg3[%c0_3, %c0_4] : memref<1x128xf32, #tpu.memory_space<vmem>>, vector<1x128xf32>
    %4 = vector.broadcast %3 : vector<1x128xf32> to vector<8x128xf32>
    %5 = arith.addf %2, %4 : vector<8x128xf32>
    %cst_5 = arith.constant -5.000000e-01 : f32
    %6 = vector.broadcast %cst_5 : f32 to vector<8x128xf32>
    %7 = arith.maximumf %5, %6 : vector<8x128xf32>
    %cst_6 = arith.constant 5.000000e-01 : f32
    %8 = vector.broadcast %cst_6 : f32 to vector<8x128xf32>
    %9 = arith.minimumf %7, %8 : vector<8x128xf32>
    %c0_7 = arith.constant 0 : index
    %c0_8 = arith.constant 0 : index
    %10 = vector.load %arg4[%c0_7, %c0_8] : memref<8x128xf32, #tpu.memory_space<vmem>>, vector<8x128xf32>
    tpu.vector_store %arg4[%c0_7, %c0_8], %9 {strides = array<i32>} : memref<8x128xf32, #tpu.memory_space<vmem>>, vector<8x128xf32>,
    return
  }
  func.func @transform_0(%arg0: i32) -> (i32, i32) {
    %c0_i32 = arith.constant 0 : i32
    %c0_i32_0 = arith.constant 0 : i32
    return %arg0, %c0_i32 : i32, i32
  }
  func.func @transform_1(%arg0: i32) -> (i32, i32) {
    %c0_i32 = arith.constant 0 : i32
    %c0_i32_0 = arith.constant 0 : i32
    %c0_i32_1 = arith.constant 0 : i32
    return %c0_i32, %c0_i32_0 : i32, i32
  }
  func.func @transform_2(%arg0: i32) -> (i32, i32) {
    %c0_i32 = arith.constant 0 : i32
    %c0_i32_0 = arith.constant 0 : i32
    %c0_i32_1 = arith.constant 0 : i32
    return %c0_i32, %c0_i32_0 : i32, i32
  }
  func.func @transform_3(%arg0: i32) -> (i32, i32) {
    %c0_i32 = arith.constant 0 : i32
    %c0_i32_0 = arith.constant 0 : i32
    return %arg0, %c0_i32 : i32, i32
  }
}

</mosaic_0001>

<llo_original>
// kernel: tpu_custom_call.1
$region0: #{tpu_custom_call.1}
  #allocation0 [shape = 'u32[]', space=smem, size = 0x4, offset = 0x4, fixed_abs, tag = 'smem constant byte address 0x4 - core index']
  #allocation1 [shape = 'u32[144,128]{1,0:T(1,128)}', space=vmem, size = 0x12000, scoped, tag = 'internal scratch']
  %s0 = inlined_call_operand.hbm [shape: f32[8,64], index: 0, kind: input, shape index: {}]
  %s1 = inlined_call_operand.hbm [shape: f32[64,128], index: 1, kind: input, shape index: {}]
  %s2 = inlined_call_operand.vmem [shape: f32[1,128], index: 2, kind: input, shape index: {}]
  %s3 = inlined_call_operand.hbm [shape: f32[8,128], index: 3, kind: output, shape index: {}]
  %s4 = sld [smem:[#allocation0]]
  $region30: #{tpu_custom_call.1} parent=0
    _
  %s6 = ssub.s32 1, %s4
  %s7 = scalar_select 0, %s6, %s4
  $region1: #{tpu_custom_call.1} parent=0
    #allocation2 [shape = 'u8[4096]{0}', space=vmem, size = 0x1000, scoped, tag = 'input window, operand 0, single buffered']
    #allocation3 [shape = 's32[1]{0}', space=sflag, size = 0x4, scoped, tag = 'scoped memory for tpu_custom_call.1']
    #allocation4 [shape = 's32[1]{0}', space=sflag, size = 0x4, scoped, tag = 'scoped memory for tpu_custom_call.1']
    #allocation5 [shape = 'u8[32768]{0}', space=vmem, size = 0x8000, scoped, tag = 'input window, operand 1, single buffered']
    #allocation6 [shape = 's32[1]{0}', space=sflag, size = 0x4, scoped, tag = 'scoped memory for tpu_custom_call.1']
    #allocation7 [shape = 'u8[4096]{0}', space=vmem, size = 0x1000, scoped, tag = 'output window, operand 0, single buffered']
    %8 = vsyncpa [#allocation3], 0
    %9 = vsyncpa [#allocation6], 0
    %10 = vsyncpa [#allocation4], 0
    // Predicated region
    $region2: #{tpu_custom_call.1} parent=1 // pred_check
      _
    $region3: #{tpu_custom_call.1} parent=1 // pred_check_branch
      %12 = sbr.rel (0) target = $region5
    $region4: #{tpu_custom_call.1} parent=1 // pred_region
      %s14 = ssub.s32 128, 128
      %15 = vsyncadd [#allocation3], %s14
      %s17 = sshll.u32 [#allocation2], 4
      %s18 = int_to_ptr.vmem [resolvable:$true] %s17
      %20 = dma.hbm_to_vmem [thread:$0]  %s0, 128, %s18, [#allocation3]
    $region5: #{tpu_custom_call.1} parent=1 // pred_fallthru
      _
    // Predicated region
    $region6: #{tpu_custom_call.1} parent=1 // pred_check
      _
    $region7: #{tpu_custom_call.1} parent=1 // pred_check_branch
      %22 = sbr.rel (0) target = $region9
    $region8: #{tpu_custom_call.1} parent=1 // pred_region
      %s24 = ssub.s32 1024, 1024
      %25 = vsyncadd [#allocation6], %s24
      %s26 = sshll.u32 [#allocation5], 4
      %s27 = int_to_ptr.vmem [resolvable:$true] %s26
      %32 = dma.hbm_to_vmem [thread:$0]  %s1, 1024, %s27, [#allocation6], 128, 128, 8
    $region9: #{tpu_custom_call.1} parent=1 // pred_fallthru
      _
    // Predicated region
    $region10: #{tpu_custom_call.1} parent=1 // pred_check
      _
    $region11: #{tpu_custom_call.1} parent=1 // pred_check_branch
      %34 = sbr.rel (0) target = $region13
    $region12: #{tpu_custom_call.1} parent=1 // pred_region
      _
    $region13: #{tpu_custom_call.1} parent=1 // pred_fallthru
      _
    // Predicated region
    $region14: #{tpu_custom_call.1} parent=1 // pred_check
      _
    $region15: #{tpu_custom_call.1} parent=1 // pred_check_branch
      %36 = sbr.rel (0) target = $region17
    $region16: #{tpu_custom_call.1} parent=1 // pred_region
      %37 = dma.done [#allocation3], 128
    $region17: #{tpu_custom_call.1} parent=1 // pred_fallthru
      _
    // Predicated region
    $region18: #{tpu_custom_call.1} parent=1 // pred_check
      _
    $region19: #{tpu_custom_call.1} parent=1 // pred_check_branch
      %39 = sbr.rel (0) target = $region21
    $region20: #{tpu_custom_call.1} parent=1 // pred_region
      %40 = dma.done [#allocation6], 1024
    $region21: #{tpu_custom_call.1} parent=1 // pred_fallthru
      _
    %v41 = vld [vmem:[#allocation2] sm:$0xff]
    %v42 = vld [vmem:[#allocation5] sm:$0xff]
    %v43 = vld [vmem:[#allocation5 + $0x8] sm:$0xff]
    %v44 = vld [vmem:[#allocation5 + $0x10] sm:$0xff]
    %v45 = vld [vmem:[#allocation5 + $0x18] sm:$0xff]
    %v46 = vld [vmem:[#allocation5 + $0x20] sm:$0xff]
    %v47 = vld [vmem:[#allocation5 + $0x28] sm:$0xff]
    %v48 = vld [vmem:[#allocation5 + $0x30] sm:$0xff]
    %v49 = vld [vmem:[#allocation5 + $0x38] sm:$0xff]
    %v50 = vld [vmem:[%s2] sm:$0x1]
    %v52 = vlaneseq
    %v53 = vshrl.u32 %v52, 7
    %v54 = vsub.s32 0, %v53
    %v55 = vrot.slane %v50, %v54
    %vm57 = vcmask 523264
    %v59 = vsel %vm57, %v41, 0
    %61 = vmatprep.subr.mxu0 0.0
    %62 = vmatpush1.msra.mxu0 0.0
    %63 = vmatprep.subr.mxu0 0.0
    %64 = vmatpush1.msra.mxu0 0.0
    %65 = vmatprep.subr.mxu0 0.0
    %66 = vmatpush1.msra.mxu0 0.0
    %67 = vmatprep.subr.mxu0 0.0
    %68 = vmatpush1.msra.mxu0 0.0
    %69 = vmatprep.subr.mxu0 0.0
    %70 = vmatpush1.msra.mxu0 0.0
    %71 = vmatprep.subr.mxu0 0.0
    %72 = vmatpush1.msra.mxu0 0.0
    %73 = vmatprep.subr.mxu0 0.0
    %74 = vmatpush1.msra.mxu0 0.0
    %75 = vmatprep.subr.mxu0 0.0
    %76 = vmatpush1.msra.mxu0 0.0
    %77 = vmatprep.subr.mxu0 0.0
    %78 = vmatpush1.msra.mxu0 %v49
    %79 = vmatprep.subr.mxu0 0.0
    %80 = vmatpush1.msra.mxu0 %v48
    %81 = vmatprep.subr.mxu0 0.0
    %82 = vmatpush1.msra.mxu0 %v47
    %83 = vmatprep.subr.mxu0 0.0
    %84 = vmatpush1.msra.mxu0 %v46
    %85 = vmatprep.subr.mxu0 0.0
    %86 = vmatpush1.msra.mxu0 %v45
    %87 = vmatprep.subr.mxu0 0.0
    %88 = vmatpush1.msra.mxu0 %v44
    %89 = vmatprep.subr.mxu0 0.0
    %90 = vmatpush1.msra.mxu0 %v43
    %91 = vmatprep.subr.mxu0 0.0
    %92 = vmatpush1.msra.mxu0 %v42
    %93 = vmatprep.subr.mxu0 0.0
    %94 = vmatpush2.msra.mxu0 0.0
    %95 = vmatprep.subr.mxu0 0.0
    %96 = vmatpush2.msra.mxu0 0.0
    %97 = vmatprep.subr.mxu0 0.0
    %98 = vmatpush2.msra.mxu0 0.0
    %99 = vmatprep.subr.mxu0 0.0
    %100 = vmatpush2.msra.mxu0 0.0
    %101 = vmatprep.subr.mxu0 0.0
    %102 = vmatpush2.msra.mxu0 0.0
    %103 = vmatprep.subr.mxu0 0.0
    %104 = vmatpush2.msra.mxu0 0.0
    %105 = vmatprep.subr.mxu0 0.0
    %106 = vmatpush2.msra.mxu0 0.0
    %107 = vmatprep.subr.mxu0 0.0
    %108 = vmatpush2.msra.mxu0 0.0
    %109 = vmatprep.subr.mxu0 0.0
    %110 = vmatpush2.msra.mxu0 0.0
    %111 = vmatprep.subr.mxu0 0.0
    %112 = vmatpush2.msra.mxu0 0.0
    %113 = vmatprep.subr.mxu0 0.0
    %114 = vmatpush2.msra.mxu0 0.0
    %115 = vmatprep.subr.mxu0 0.0
    %116 = vmatpush2.msra.mxu0 0.0
    %117 = vmatprep.subr.mxu0 0.0
    %118 = vmatpush2.msra.mxu0 0.0
    %119 = vmatprep.subr.mxu0 0.0
    %120 = vmatpush2.msra.mxu0 0.0
    %121 = vmatprep.subr.mxu0 0.0
    %122 = vmatpush2.msra.mxu0 0.0
    %123 = vmatprep.subr.mxu0 0.0
    %124 = vmatpush2.msra.mxu0 0.0
    %125 = vmatprep.mubr.f32.mxu0 0.0
    %126 = vmatmul.mubr.f32.gmra.mxu0 %v59
    %v127 = vpop.f32.mrf.mxu0
    %v128 = vadd.f32 %v55, %v127
    %v129 = vpop.f32.mrf.mxu0
    %130 = vdwg.mxu0
    %v131 = vmax.f32 %v128, -0.5
    %v132 = vmin.f32 %v131, 0.5
    %133 = vst [vmem:[#allocation7] sm:$0xff] %v132
    // Predicated region
    $region22: #{tpu_custom_call.1} parent=1 // pred_check
      _
    $region23: #{tpu_custom_call.1} parent=1 // pred_check_branch
      %135 = sbr.rel (0) target = $region25
    $region24: #{tpu_custom_call.1} parent=1 // pred_region
      %s137 = ssub.s32 128, 128
      %138 = vsyncadd [#allocation4], %s137
      %s140 = sshll.u32 [#allocation7], 4
      %s141 = int_to_ptr.vmem [resolvable:$true] %s140
      %143 = dma.vmem_to_hbm [thread:$0]  %s141, 128, %s3, [#allocation4]
    $region25: #{tpu_custom_call.1} parent=1 // pred_fallthru
      _
    // Predicated region
    $region26: #{tpu_custom_call.1} parent=1 // pred_check
      _
    $region27: #{tpu_custom_call.1} parent=1 // pred_check_branch
      %145 = sbr.rel (0) target = $region29
    $region28: #{tpu_custom_call.1} parent=1 // pred_region
      %146 = dma.done [#allocation4], 128
    $region29: #{tpu_custom_call.1} parent=1 // pred_fallthru
      _
    %147 = vsyncpa [#allocation3], 1
    %148 = vsyncpa [#allocation6], 1
    %149 = vsyncpa [#allocation4], 1

</llo_original>
